<compile_context>
chip_gen: v6e
topology: v6e:2x2x1
jax: 0.10.0
libtpu: 0.0.40
codegen_flags: <defaults>
</compile_context>

<pallas_src>
import functools

import jax
import jax.numpy as jnp
import numpy as np
from jax.experimental import pallas as pl
from jax.experimental.pallas import tpu as pltpu


def _round_up(x: int, m: int) -> int:
    return ((x + m - 1) // m) * m


def _pick_tile(n: int, minimum: int, candidates):
    """Pick the largest tile from `candidates` whose padding overhead over the
    minimal (multiple-of-`minimum`) padding stays within ~12.5% of it."""
    min_pad = _round_up(n, minimum)
    allow = min_pad // 8
    for t in candidates:
        pad = _round_up(n, t)
        if pad - min_pad <= allow:
            return t, pad
    return minimum, min_pad


def _rel_trafo_kernel(ri_ref, rj_ref, ti_ref, tj_ref, out_ref, *, emit_bottom_row):
    # Per (batch, i-tile, j-tile) block:
    #   ri_ref : (1, TM, 9)   ri[m, 3*p + a] = R[b, i0 + m, p, a]
    #   rj_ref : (1, 9, TN)   rj[3*p + c, n] = R[b, j0 + n, p, c]
    #   ti_ref : (1, TM, 3)   ti[m, p]       = t[b, i0 + m, p]
    #   tj_ref : (1, 3, TN)   tj[p, n]       = t[b, j0 + n, p]
    #   out_ref: (1, C, TM, TN)  channel 4*a + c   (C = 12 or 16):
    #       c < 3          -> (R_i^T R_j)[a, c]
    #       c == 3, a < 3  -> (R_i^T (t_j - t_i))[a]
    #       a == 3         -> constant bottom row [0, 0, 0, 1]  (only if C == 16)
    ri = ri_ref[0]
    rj = rj_ref[0]
    ti = ti_ref[0]
    tj = tj_ref[0]
    tm, tn = ri.shape[0], rj.shape[1]
    shape = (tm, tn)

    # Hoisted translation differences dt[p] = t_j[p] - t_i[p]  (each reused 3x).
    dt = [tj[p:p + 1, :] - ti[:, p:p + 1] for p in range(3)]  # (TM, TN) each

    for a in range(3):
        # Hoist the (TM,1) -> (TM,TN) lane-broadcasts of R_i's a-column
        # (each reused 4x: three rotation channels + one translation channel).
        ria = [jnp.broadcast_to(ri[:, 3 * p + a:3 * p + a + 1], shape)
               for p in range(3)]
        for c in range(3):
            out_ref[0, 4 * a + c] = (ria[0] * rj[c:c + 1, :]
                                     + ria[1] * rj[3 + c:3 + c + 1, :]
                                     + ria[2] * rj[6 + c:6 + c + 1, :])
        out_ref[0, 4 * a + 3] = ria[0] * dt[0] + ria[1] * dt[1] + ria[2] * dt[2]

    if emit_bottom_row:
        # Only for the strict (B,N,N,4,4) path — cheaper than materializing the
        # bottom row with an extra XLA pass in the wrapper.
        zero = jnp.zeros(shape, jnp.float32)
        out_ref[0, 12] = zero
        out_ref[0, 13] = zero
        out_ref[0, 14] = zero
        out_ref[0, 15] = jnp.ones(shape, jnp.float32)


def _pairwise_rel_channels(T, n_channels):
    """Run the kernel; returns the padded (B, n_channels, Ni_pad, Nj_pad) slab."""
    T = T.astype(jnp.float32)
    B, N = T.shape[0], T.shape[1]

    # --- compact component layouts (small, glue-only, O(N)) ---
    R = T[..., :3, :3]                                  # (B, N, 3, 3)
    t = T[..., :3, 3]                                   # (B, N, 3)
    r_i = R.reshape(B, N, 9)                            # r_i[b, n, 3p+a] = R[b,n,p,a]
    r_j = jnp.transpose(r_i, (0, 2, 1))                 # (B, 9, N)
    t_i = t                                             # (B, N, 3)
    t_j = jnp.transpose(t, (0, 2, 1))                   # (B, 3, N)

    # --- asymmetric tiles: i (sublane) only needs multiples of 8,
    #     j (lane) multiples of 128; output block capped at ~6-8 MiB. ---
    tm, ni_pad = _pick_tile(N, 8, (256, 128, 64, 32, 16, 8))
    tn, nj_pad = _pick_tile(N, 128, (512, 384, 256, 128))

    if ni_pad != N:
        r_i = jnp.pad(r_i, ((0, 0), (0, ni_pad - N), (0, 0)))
        t_i = jnp.pad(t_i, ((0, 0), (0, ni_pad - N), (0, 0)))
    if nj_pad != N:
        r_j = jnp.pad(r_j, ((0, 0), (0, 0), (0, nj_pad - N)))
        t_j = jnp.pad(t_j, ((0, 0), (0, 0), (0, nj_pad - N)))

    grid = (B, ni_pad // tm, nj_pad // tn)
    kernel = functools.partial(_rel_trafo_kernel,
                               emit_bottom_row=(n_channels == 16))

    out = pl.pallas_call(
        kernel,
        out_shape=jax.ShapeDtypeStruct((B, n_channels, ni_pad, nj_pad), jnp.float32),
        grid=grid,
        in_specs=[
            pl.BlockSpec((1, tm, 9), lambda b, i, j: (b, i, 0)),
            pl.BlockSpec((1, 9, tn), lambda b, i, j: (b, 0, j)),
            pl.BlockSpec((1, tm, 3), lambda b, i, j: (b, i, 0)),
            pl.BlockSpec((1, 3, tn), lambda b, i, j: (b, 0, j)),
        ],
        out_specs=pl.BlockSpec((1, n_channels, tm, tn), lambda b, i, j: (b, 0, i, j)),
        compiler_params=pltpu.CompilerParams(
            dimension_semantics=("parallel", "parallel", "parallel"),
            vmem_limit_bytes=32 * 1024 * 1024,
        ),
    )(r_i, r_j, t_i, t_j)
    return out, N


@jax.jit
def relative_frame_transformation_channels(T):
    """Recommended consumer form: channel-major (B, 12, N, N), channel 4*a + c =
    row a / col c of T_i^{-1} T_j (a,c < 3 rotation; c==3 translation). The
    homogeneous bottom row [0,0,0,1] is implicit — no constant channels are
    stored and no re-layout pass is performed (single HBM write pass)."""
    out12, N = _pairwise_rel_channels(T, 12)
    return out12[:, :, :N, :N]


@jax.jit
def relative_frame_transformation(T):
    """Strict module contract: out[b, i, j] = T[b, i]^{-1} @ T[b, j], (B,N,N,4,4)."""
    out16, N = _pairwise_rel_channels(T, 16)
    B = T.shape[0]
    # Exactly one fused XLA crop + transpose to the dense 4x4 layout. Consumers
    # that accept the channel-major slab should use
    # relative_frame_transformation_channels() and skip this pass entirely.
    out = jnp.transpose(out16[:, :, :N, :N], (0, 2, 3, 1)).reshape(B, N, N, 4, 4)
    return out


class LocalRelTrafo:
    """JAX/Pallas equivalent of the (parameter-free) PyTorch local_rel_trafo module."""

    def __call__(self, T):
        return relative_frame_transformation(T)

    @staticmethod
    def channels(T):
        return relative_frame_transformation_channels(T)


def _reference(T):
    """Pure-JAX reference for correctness checking."""
    T = T.astype(jnp.float32)
    R = T[..., :3, :3]
    t = T[..., :3, 3]
    R_rel = jnp.einsum('bipa,bjpc->bijac', R, R)
    dt = t[:, None, :, :] - t[:, :, None, :]            # [b, i, j, p] = t_j - t_i
    t_rel = jnp.einsum('bipa,bijp->bija', R, dt)
    B, N = T.shape[0], T.shape[1]
    out = jnp.zeros((B, N, N, 4, 4), jnp.float32)
    out = out.at[..., :3, :3].set(R_rel)
    out = out.at[..., :3, 3].set(t_rel)
    out = out.at[..., 3, 3].set(1.0)
    return out


if __name__ == "__main__":
    B, N = 2, 16
    key = jax.random.PRNGKey(0)
    k1, k2 = jax.random.split(key)

    # deterministic rigid frames: rotations from QR (det fixed to +1), random translations
    A = jax.random.normal(k1, (B, N, 3, 3), dtype=jnp.float32)
    Q, _ = jnp.linalg.qr(A)
    sign = jnp.sign(jnp.linalg.det(Q))[..., None, None]
    Q = Q * sign
    t = jax.random.normal(k2, (B, N, 3), dtype=jnp.float32)

    T = jnp.zeros((B, N, 4, 4), jnp.float32)
    T = T.at[..., :3, :3].set(Q)
    T = T.at[..., :3, 3].set(t)
    T = T.at[..., 3, 3].set(1.0)

    model = LocalRelTrafo()
    out = jax.block_until_ready(model(T))
    ref = jax.block_until_ready(_reference(T))
    np.testing.assert_allclose(np.asarray(out), np.asarray(ref), atol=1e-5, rtol=1e-5)

    # channel-major (store-minimal) product
    ch = jax.block_until_ready(relative_frame_transformation_channels(T))
    ref_ch = jnp.transpose(ref.reshape(B, N, N, 16)[..., :12], (0, 3, 1, 2))
    np.testing.assert_allclose(np.asarray(ch), np.asarray(ref_ch), atol=1e-5, rtol=1e-5)

    print("KERNEL_OK")
</pallas_src>

<mosaic_0001>
module attributes {stable_mosaic.version = 11 : i64} {
  func.func @_rel_trafo_kernel(%arg0: i32, %arg1: i32, %arg2: i32, %arg3: memref<1x16x9xf32, #tpu.memory_space<vmem>>, %arg4: memref<1x9x128xf32, #tpu.memory_space<vmem>>, %arg5: memref<1x16x3xf32, #tpu.memory_space<vmem>>, %arg6: memref<1x3x128xf32, #tpu.memory_space<vmem>>, %arg7: memref<1x16x16x128xf32, #tpu.memory_space<vmem>>) attributes {dimension_semantics = [#tpu.dimension_semantics<parallel>, #tpu.dimension_semantics<parallel>, #tpu.dimension_semantics<parallel>], iteration_bounds = array<i64: 2, 1, 1>, scalar_prefetch = 0 : i64, scratch_operands = 0 : i64, tpu.core_type = #tpu.core_type<tc>, window_params = [{transform_indices = @transform_0, window_bounds = array<i64: 1, 16, 9>}, {transform_indices = @transform_1, window_bounds = array<i64: 1, 9, 128>}, {transform_indices = @transform_2, window_bounds = array<i64: 1, 16, 3>}, {transform_indices = @transform_3, window_bounds = array<i64: 1, 3, 128>}, {transform_indices = @transform_4, window_bounds = array<i64: 1, 16, 16, 128>}]} {
    %c0 = arith.constant 0 : index
    %c0_0 = arith.constant 0 : index
    %c0_1 = arith.constant 0 : index
    %0 = vector.load %arg3[%c0, %c0_0, %c0_1] : memref<1x16x9xf32, #tpu.memory_space<vmem>>, vector<1x16x9xf32>
    %1 = vector.shape_cast %0 : vector<1x16x9xf32> to vector<16x9xf32>
    %c0_2 = arith.constant 0 : index
    %c0_3 = arith.constant 0 : index
    %c0_4 = arith.constant 0 : index
    %2 = vector.load %arg4[%c0_2, %c0_3, %c0_4] : memref<1x9x128xf32, #tpu.memory_space<vmem>>, vector<1x9x128xf32>
    %3 = vector.shape_cast %2 : vector<1x9x128xf32> to vector<9x128xf32>
    %c0_5 = arith.constant 0 : index
    %c0_6 = arith.constant 0 : index
    %c0_7 = arith.constant 0 : index
    %4 = vector.load %arg5[%c0_5, %c0_6, %c0_7] : memref<1x16x3xf32, #tpu.memory_space<vmem>>, vector<1x16x3xf32>
    %5 = vector.shape_cast %4 : vector<1x16x3xf32> to vector<16x3xf32>
    %c0_8 = arith.constant 0 : index
    %c0_9 = arith.constant 0 : index
    %c0_10 = arith.constant 0 : index
    %6 = vector.load %arg6[%c0_8, %c0_9, %c0_10] : memref<1x3x128xf32, #tpu.memory_space<vmem>>, vector<1x3x128xf32>
    %7 = vector.shape_cast %6 : vector<1x3x128xf32> to vector<3x128xf32>
    %8 = vector.extract_strided_slice %7 {offsets = [0, 0], sizes = [1, 128], strides = [1, 1]} : vector<3x128xf32> to vector<1x128xf32>
    %9 = vector.extract_strided_slice %5 {offsets = [0, 0], sizes = [16, 1], strides = [1, 1]} : vector<16x3xf32> to vector<16x1xf32>
    %10 = vector.broadcast %8 : vector<1x128xf32> to vector<16x128xf32>
    %11 = vector.broadcast %9 : vector<16x1xf32> to vector<16x128xf32>
    %12 = arith.subf %10, %11 : vector<16x128xf32>
    %13 = vector.extract_strided_slice %7 {offsets = [1, 0], sizes = [1, 128], strides = [1, 1]} : vector<3x128xf32> to vector<1x128xf32>
    %14 = vector.extract_strided_slice %5 {offsets = [0, 1], sizes = [16, 1], strides = [1, 1]} : vector<16x3xf32> to vector<16x1xf32>
    %15 = vector.broadcast %13 : vector<1x128xf32> to vector<16x128xf32>
    %16 = vector.broadcast %14 : vector<16x1xf32> to vector<16x128xf32>
    %17 = arith.subf %15, %16 : vector<16x128xf32>
    %18 = vector.extract_strided_slice %7 {offsets = [2, 0], sizes = [1, 128], strides = [1, 1]} : vector<3x128xf32> to vector<1x128xf32>
    %19 = vector.extract_strided_slice %5 {offsets = [0, 2], sizes = [16, 1], strides = [1, 1]} : vector<16x3xf32> to vector<16x1xf32>
    %20 = vector.broadcast %18 : vector<1x128xf32> to vector<16x128xf32>
    %21 = vector.broadcast %19 : vector<16x1xf32> to vector<16x128xf32>
    %22 = arith.subf %20, %21 : vector<16x128xf32>
    %23 = vector.extract_strided_slice %1 {offsets = [0, 0], sizes = [16, 1], strides = [1, 1]} : vector<16x9xf32> to vector<16x1xf32>
    %24 = vector.shape_cast %23 : vector<16x1xf32> to vector<16x1xf32>
    %25 = vector.broadcast %24 : vector<16x1xf32> to vector<16x128xf32>
    %26 = vector.extract_strided_slice %1 {offsets = [0, 3], sizes = [16, 1], strides = [1, 1]} : vector<16x9xf32> to vector<16x1xf32>
    %27 = vector.shape_cast %26 : vector<16x1xf32> to vector<16x1xf32>
    %28 = vector.broadcast %27 : vector<16x1xf32> to vector<16x128xf32>
    %29 = vector.extract_strided_slice %1 {offsets = [0, 6], sizes = [16, 1], strides = [1, 1]} : vector<16x9xf32> to vector<16x1xf32>
    %30 = vector.shape_cast %29 : vector<16x1xf32> to vector<16x1xf32>
    %31 = vector.broadcast %30 : vector<16x1xf32> to vector<16x128xf32>
    %32 = vector.extract_strided_slice %3 {offsets = [0, 0], sizes = [1, 128], strides = [1, 1]} : vector<9x128xf32> to vector<1x128xf32>
    %33 = vector.broadcast %32 : vector<1x128xf32> to vector<16x128xf32>
    %34 = arith.mulf %25, %33 : vector<16x128xf32>
    %35 = vector.extract_strided_slice %3 {offsets = [3, 0], sizes = [1, 128], strides = [1, 1]} : vector<9x128xf32> to vector<1x128xf32>
    %36 = vector.broadcast %35 : vector<1x128xf32> to vector<16x128xf32>
    %37 = arith.mulf %28, %36 : vector<16x128xf32>
    %38 = arith.addf %34, %37 : vector<16x128xf32>
    %39 = vector.extract_strided_slice %3 {offsets = [6, 0], sizes = [1, 128], strides = [1, 1]} : vector<9x128xf32> to vector<1x128xf32>
    %40 = vector.broadcast %39 : vector<1x128xf32> to vector<16x128xf32>
    %41 = arith.mulf %31, %40 : vector<16x128xf32>
    %42 = arith.addf %38, %41 : vector<16x128xf32>
    %c0_11 = arith.constant 0 : index
    %c0_12 = arith.constant 0 : index
    %c0_13 = arith.constant 0 : index
    %c0_14 = arith.constant 0 : index
    %43 = vector.load %arg7[%c0_11, %c0_12, %c0_13, %c0_14] : memref<1x16x16x128xf32, #tpu.memory_space<vmem>>, vector<1x1x16x128xf32>
    %44 = vector.shape_cast %43 : vector<1x1x16x128xf32> to vector<16x128xf32>
    %45 = vector.shape_cast %42 : vector<16x128xf32> to vector<1x1x16x128xf32>
    tpu.vector_store %arg7[%c0_11, %c0_12, %c0_13, %c0_14], %45 {strides = array<i32>} : memref<1x16x16x128xf32, #tpu.memory_space<vmem>>, vector<1x1x16x128xf32>,
    %46 = vector.extract_strided_slice %3 {offsets = [1, 0], sizes = [1, 128], strides = [1, 1]} : vector<9x128xf32> to vector<1x128xf32>
    %47 = vector.broadcast %46 : vector<1x128xf32> to vector<16x128xf32>
    %48 = arith.mulf %25, %47 : vector<16x128xf32>
    %49 = vector.extract_strided_slice %3 {offsets = [4, 0], sizes = [1, 128], strides = [1, 1]} : vector<9x128xf32> to vector<1x128xf32>
    %50 = vector.broadcast %49 : vector<1x128xf32> to vector<16x128xf32>
    %51 = arith.mulf %28, %50 : vector<16x128xf32>
    %52 = arith.addf %48, %51 : vector<16x128xf32>
    %53 = vector.extract_strided_slice %3 {offsets = [7, 0], sizes = [1, 128], strides = [1, 1]} : vector<9x128xf32> to vector<1x128xf32>
    %54 = vector.broadcast %53 : vector<1x128xf32> to vector<16x128xf32>
    %55 = arith.mulf %31, %54 : vector<16x128xf32>
    %56 = arith.addf %52, %55 : vector<16x128xf32>
    %c0_15 = arith.constant 0 : index
    %c1 = arith.constant 1 : index
    %c0_16 = arith.constant 0 : index
    %c0_17 = arith.constant 0 : index
    %57 = vector.load %arg7[%c0_15, %c1, %c0_16, %c0_17] : memref<1x16x16x128xf32, #tpu.memory_space<vmem>>, vector<1x1x16x128xf32>
    %58 = vector.shape_cast %57 : vector<1x1x16x128xf32> to vector<16x128xf32>
    %59 = vector.shape_cast %56 : vector<16x128xf32> to vector<1x1x16x128xf32>
    tpu.vector_store %arg7[%c0_15, %c1, %c0_16, %c0_17], %59 {strides = array<i32>} : memref<1x16x16x128xf32, #tpu.memory_space<vmem>>, vector<1x1x16x128xf32>,
    %60 = vector.extract_strided_slice %3 {offsets = [2, 0], sizes = [1, 128], strides = [1, 1]} : vector<9x128xf32> to vector<1x128xf32>
    %61 = vector.broadcast %60 : vector<1x128xf32> to vector<16x128xf32>
    %62 = arith.mulf %25, %61 : vector<16x128xf32>
    %63 = vector.extract_strided_slice %3 {offsets = [5, 0], sizes = [1, 128], strides = [1, 1]} : vector<9x128xf32> to vector<1x128xf32>
    %64 = vector.broadcast %63 : vector<1x128xf32> to vector<16x128xf32>
    %65 = arith.mulf %28, %64 : vector<16x128xf32>
    %66 = arith.addf %62, %65 : vector<16x128xf32>
    %67 = vector.extract_strided_slice %3 {offsets = [8, 0], sizes = [1, 128], strides = [1, 1]} : vector<9x128xf32> to vector<1x128xf32>
    %68 = vector.broadcast %67 : vector<1x128xf32> to vector<16x128xf32>
    %69 = arith.mulf %31, %68 : vector<16x128xf32>
    %70 = arith.addf %66, %69 : vector<16x128xf32>
    %c0_18 = arith.constant 0 : index
    %c2 = arith.constant 2 : index
    %c0_19 = arith.constant 0 : index
    %c0_20 = arith.constant 0 : index
    %71 = vector.load %arg7[%c0_18, %c2, %c0_19, %c0_20] : memref<1x16x16x128xf32, #tpu.memory_space<vmem>>, vector<1x1x16x128xf32>
    %72 = vector.shape_cast %71 : vector<1x1x16x128xf32> to vector<16x128xf32>
    %73 = vector.shape_cast %70 : vector<16x128xf32> to vector<1x1x16x128xf32>
    tpu.vector_store %arg7[%c0_18, %c2, %c0_19, %c0_20], %73 {strides = array<i32>} : memref<1x16x16x128xf32, #tpu.memory_space<vmem>>, vector<1x1x16x128xf32>,
    %74 = arith.mulf %25, %12 : vector<16x128xf32>
    %75 = arith.mulf %28, %17 : vector<16x128xf32>
    %76 = arith.addf %74, %75 : vector<16x128xf32>
    %77 = arith.mulf %31, %22 : vector<16x128xf32>
    %78 = arith.addf %76, %77 : vector<16x128xf32>
    %c0_21 = arith.constant 0 : index
    %c3 = arith.constant 3 : index
    %c0_22 = arith.constant 0 : index
    %c0_23 = arith.constant 0 : index
    %79 = vector.load %arg7[%c0_21, %c3, %c0_22, %c0_23] : memref<1x16x16x128xf32, #tpu.memory_space<vmem>>, vector<1x1x16x128xf32>
    %80 = vector.shape_cast %79 : vector<1x1x16x128xf32> to vector<16x128xf32>
    %81 = vector.shape_cast %78 : vector<16x128xf32> to vector<1x1x16x128xf32>
    tpu.vector_store %arg7[%c0_21, %c3, %c0_22, %c0_23], %81 {strides = array<i32>} : memref<1x16x16x128xf32, #tpu.memory_space<vmem>>, vector<1x1x16x128xf32>,
    %82 = vector.extract_strided_slice %1 {offsets = [0, 1], sizes = [16, 1], strides = [1, 1]} : vector<16x9xf32> to vector<16x1xf32>
    %83 = vector.shape_cast %82 : vector<16x1xf32> to vector<16x1xf32>
    %84 = vector.broadcast %83 : vector<16x1xf32> to vector<16x128xf32>
    %85 = vector.extract_strided_slice %1 {offsets = [0, 4], sizes = [16, 1], strides = [1, 1]} : vector<16x9xf32> to vector<16x1xf32>
    %86 = vector.shape_cast %85 : vector<16x1xf32> to vector<16x1xf32>
    %87 = vector.broadcast %86 : vector<16x1xf32> to vector<16x128xf32>
    %88 = vector.extract_strided_slice %1 {offsets = [0, 7], sizes = [16, 1], strides = [1, 1]} : vector<16x9xf32> to vector<16x1xf32>
    %89 = vector.shape_cast %88 : vector<16x1xf32> to vector<16x1xf32>
    %90 = vector.broadcast %89 : vector<16x1xf32> to vector<16x128xf32>
    %91 = vector.extract_strided_slice %3 {offsets = [0, 0], sizes = [1, 128], strides = [1, 1]} : vector<9x128xf32> to vector<1x128xf32>
    %92 = vector.broadcast %91 : vector<1x128xf32> to vector<16x128xf32>
    %93 = arith.mulf %84, %92 : vector<16x128xf32>
    %94 = vector.extract_strided_slice %3 {offsets = [3, 0], sizes = [1, 128], strides = [1, 1]} : vector<9x128xf32> to vector<1x128xf32>
    %95 = vector.broadcast %94 : vector<1x128xf32> to vector<16x128xf32>
    %96 = arith.mulf %87, %95 : vector<16x128xf32>
    %97 = arith.addf %93, %96 : vector<16x128xf32>
    %98 = vector.extract_strided_slice %3 {offsets = [6, 0], sizes = [1, 128], strides = [1, 1]} : vector<9x128xf32> to vector<1x128xf32>
    %99 = vector.broadcast %98 : vector<1x128xf32> to vector<16x128xf32>
    %100 = arith.mulf %90, %99 : vector<16x128xf32>
    %101 = arith.addf %97, %100 : vector<16x128xf32>
    %c0_24 = arith.constant 0 : index
    %c4 = arith.constant 4 : index
    %c0_25 = arith.constant 0 : index
    %c0_26 = arith.constant 0 : index
    %102 = vector.load %arg7[%c0_24, %c4, %c0_25, %c0_26] : memref<1x16x16x128xf32, #tpu.memory_space<vmem>>, vector<1x1x16x128xf32>
    %103 = vector.shape_cast %102 : vector<1x1x16x128xf32> to vector<16x128xf32>
    %104 = vector.shape_cast %101 : vector<16x128xf32> to vector<1x1x16x128xf32>
    tpu.vector_store %arg7[%c0_24, %c4, %c0_25, %c0_26], %104 {strides = array<i32>} : memref<1x16x16x128xf32, #tpu.memory_space<vmem>>, vector<1x1x16x128xf32>,
    %105 = vector.extract_strided_slice %3 {offsets = [1, 0], sizes = [1, 128], strides = [1, 1]} : vector<9x128xf32> to vector<1x128xf32>
    %106 = vector.broadcast %105 : vector<1x128xf32> to vector<16x128xf32>
    %107 = arith.mulf %84, %106 : vector<16x128xf32>
    %108 = vector.extract_strided_slice %3 {offsets = [4, 0], sizes = [1, 128], strides = [1, 1]} : vector<9x128xf32> to vector<1x128xf32>
    %109 = vector.broadcast %108 : vector<1x128xf32> to vector<16x128xf32>
    %110 = arith.mulf %87, %109 : vector<16x128xf32>
    %111 = arith.addf %107, %110 : vector<16x128xf32>
    %112 = vector.extract_strided_slice %3 {offsets = [7, 0], sizes = [1, 128], strides = [1, 1]} : vector<9x128xf32> to vector<1x128xf32>
    %113 = vector.broadcast %112 : vector<1x128xf32> to vector<16x128xf32>
    %114 = arith.mulf %90, %113 : vector<16x128xf32>
    %115 = arith.addf %111, %114 : vector<16x128xf32>
    %c0_27 = arith.constant 0 : index
    %c5 = arith.constant 5 : index
    %c0_28 = arith.constant 0 : index
    %c0_29 = arith.constant 0 : index
    %116 = vector.load %arg7[%c0_27, %c5, %c0_28, %c0_29] : memref<1x16x16x128xf32, #tpu.memory_space<vmem>>, vector<1x1x16x128xf32>
    %117 = vector.shape_cast %116 : vector<1x1x16x128xf32> to vector<16x128xf32>
    %118 = vector.shape_cast %115 : vector<16x128xf32> to vector<1x1x16x128xf32>
    tpu.vector_store %arg7[%c0_27, %c5, %c0_28, %c0_29], %118 {strides = array<i32>} : memref<1x16x16x128xf32, #tpu.memory_space<vmem>>, vector<1x1x16x128xf32>,
    %119 = vector.extract_strided_slice %3 {offsets = [2, 0], sizes = [1, 128], strides = [1, 1]} : vector<9x128xf32> to vector<1x128xf32>
    %120 = vector.broadcast %119 : vector<1x128xf32> to vector<16x128xf32>
    %121 = arith.mulf %84, %120 : vector<16x128xf32>
    %122 = vector.extract_strided_slice %3 {offsets = [5, 0], sizes = [1, 128], strides = [1, 1]} : vector<9x128xf32> to vector<1x128xf32>
    %123 = vector.broadcast %122 : vector<1x128xf32> to vector<16x128xf32>
    %124 = arith.mulf %87, %123 : vector<16x128xf32>
    %125 = arith.addf %121, %124 : vector<16x128xf32>
    %126 = vector.extract_strided_slice %3 {offsets = [8, 0], sizes = [1, 128], strides = [1, 1]} : vector<9x128xf32> to vector<1x128xf32>
    %127 = vector.broadcast %126 : vector<1x128xf32> to vector<16x128xf32>
    %128 = arith.mulf %90, %127 : vector<16x128xf32>
    %129 = arith.addf %125, %128 : vector<16x128xf32>
    %c0_30 = arith.constant 0 : index
    %c6 = arith.constant 6 : index
    %c0_31 = arith.constant 0 : index
    %c0_32 = arith.constant 0 : index
    %130 = vector.load %arg7[%c0_30, %c6, %c0_31, %c0_32] : memref<1x16x16x128xf32, #tpu.memory_space<vmem>>, vector<1x1x16x128xf32>
    %131 = vector.shape_cast %130 : vector<1x1x16x128xf32> to vector<16x128xf32>
    %132 = vector.shape_cast %129 : vector<16x128xf32> to vector<1x1x16x128xf32>
    tpu.vector_store %arg7[%c0_30, %c6, %c0_31, %c0_32], %132 {strides = array<i32>} : memref<1x16x16x128xf32, #tpu.memory_space<vmem>>, vector<1x1x16x128xf32>,
    %133 = arith.mulf %84, %12 : vector<16x128xf32>
    %134 = arith.mulf %87, %17 : vector<16x128xf32>
    %135 = arith.addf %133, %134 : vector<16x128xf32>
    %136 = arith.mulf %90, %22 : vector<16x128xf32>
    %137 = arith.addf %135, %136 : vector<16x128xf32>
    %c0_33 = arith.constant 0 : index
    %c7 = arith.constant 7 : index
    %c0_34 = arith.constant 0 : index
    %c0_35 = arith.constant 0 : index
    %138 = vector.load %arg7[%c0_33, %c7, %c0_34, %c0_35] : memref<1x16x16x128xf32, #tpu.memory_space<vmem>>, vector<1x1x16x128xf32>
    %139 = vector.shape_cast %138 : vector<1x1x16x128xf32> to vector<16x128xf32>
    %140 = vector.shape_cast %137 : vector<16x128xf32> to vector<1x1x16x128xf32>
    tpu.vector_store %arg7[%c0_33, %c7, %c0_34, %c0_35], %140 {strides = array<i32>} : memref<1x16x16x128xf32, #tpu.memory_space<vmem>>, vector<1x1x16x128xf32>,
    %141 = vector.extract_strided_slice %1 {offsets = [0, 2], sizes = [16, 1], strides = [1, 1]} : vector<16x9xf32> to vector<16x1xf32>
    %142 = vector.shape_cast %141 : vector<16x1xf32> to vector<16x1xf32>
    %143 = vector.broadcast %142 : vector<16x1xf32> to vector<16x128xf32>
    %144 = vector.extract_strided_slice %1 {offsets = [0, 5], sizes = [16, 1], strides = [1, 1]} : vector<16x9xf32> to vector<16x1xf32>
    %145 = vector.shape_cast %144 : vector<16x1xf32> to vector<16x1xf32>
    %146 = vector.broadcast %145 : vector<16x1xf32> to vector<16x128xf32>
    %147 = vector.extract_strided_slice %1 {offsets = [0, 8], sizes = [16, 1], strides = [1, 1]} : vector<16x9xf32> to vector<16x1xf32>
    %148 = vector.shape_cast %147 : vector<16x1xf32> to vector<16x1xf32>
    %149 = vector.broadcast %148 : vector<16x1xf32> to vector<16x128xf32>
    %150 = vector.extract_strided_slice %3 {offsets = [0, 0], sizes = [1, 128], strides = [1, 1]} : vector<9x128xf32> to vector<1x128xf32>
    %151 = vector.broadcast %150 : vector<1x128xf32> to vector<16x128xf32>
    %152 = arith.mulf %143, %151 : vector<16x128xf32>
    %153 = vector.extract_strided_slice %3 {offsets = [3, 0], sizes = [1, 128], strides = [1, 1]} : vector<9x128xf32> to vector<1x128xf32>
    %154 = vector.broadcast %153 : vector<1x128xf32> to vector<16x128xf32>
    %155 = arith.mulf %146, %154 : vector<16x128xf32>
    %156 = arith.addf %152, %155 : vector<16x128xf32>
    %157 = vector.extract_strided_slice %3 {offsets = [6, 0], sizes = [1, 128], strides = [1, 1]} : vector<9x128xf32> to vector<1x128xf32>
    %158 = vector.broadcast %157 : vector<1x128xf32> to vector<16x128xf32>
    %159 = arith.mulf %149, %158 : vector<16x128xf32>
    %160 = arith.addf %156, %159 : vector<16x128xf32>
    %c0_36 = arith.constant 0 : index
    %c8 = arith.constant 8 : index
    %c0_37 = arith.constant 0 : index
    %c0_38 = arith.constant 0 : index
    %161 = vector.load %arg7[%c0_36, %c8, %c0_37, %c0_38] : memref<1x16x16x128xf32, #tpu.memory_space<vmem>>, vector<1x1x16x128xf32>
    %162 = vector.shape_cast %161 : vector<1x1x16x128xf32> to vector<16x128xf32>
    %163 = vector.shape_cast %160 : vector<16x128xf32> to vector<1x1x16x128xf32>
    tpu.vector_store %arg7[%c0_36, %c8, %c0_37, %c0_38], %163 {strides = array<i32>} : memref<1x16x16x128xf32, #tpu.memory_space<vmem>>, vector<1x1x16x128xf32>,
    %164 = vector.extract_strided_slice %3 {offsets = [1, 0], sizes = [1, 128], strides = [1, 1]} : vector<9x128xf32> to vector<1x128xf32>
    %165 = vector.broadcast %164 : vector<1x128xf32> to vector<16x128xf32>
    %166 = arith.mulf %143, %165 : vector<16x128xf32>
    %167 = vector.extract_strided_slice %3 {offsets = [4, 0], sizes = [1, 128], strides = [1, 1]} : vector<9x128xf32> to vector<1x128xf32>
    %168 = vector.broadcast %167 : vector<1x128xf32> to vector<16x128xf32>
    %169 = arith.mulf %146, %168 : vector<16x128xf32>
    %170 = arith.addf %166, %169 : vector<16x128xf32>
    %171 = vector.extract_strided_slice %3 {offsets = [7, 0], sizes = [1, 128], strides = [1, 1]} : vector<9x128xf32> to vector<1x128xf32>
    %172 = vector.broadcast %171 : vector<1x128xf32> to vector<16x128xf32>
    %173 = arith.mulf %149, %172 : vector<16x128xf32>
    %174 = arith.addf %170, %173 : vector<16x128xf32>
    %c0_39 = arith.constant 0 : index
    %c9 = arith.constant 9 : index
    %c0_40 = arith.constant 0 : index
    %c0_41 = arith.constant 0 : index
    %175 = vector.load %arg7[%c0_39, %c9, %c0_40, %c0_41] : memref<1x16x16x128xf32, #tpu.memory_space<vmem>>, vector<1x1x16x128xf32>
    %176 = vector.shape_cast %175 : vector<1x1x16x128xf32> to vector<16x128xf32>
    %177 = vector.shape_cast %174 : vector<16x128xf32> to vector<1x1x16x128xf32>
    tpu.vector_store %arg7[%c0_39, %c9, %c0_40, %c0_41], %177 {strides = array<i32>} : memref<1x16x16x128xf32, #tpu.memory_space<vmem>>, vector<1x1x16x128xf32>,
    %178 = vector.extract_strided_slice %3 {offsets = [2, 0], sizes = [1, 128], strides = [1, 1]} : vector<9x128xf32> to vector<1x128xf32>
    %179 = vector.broadcast %178 : vector<1x128xf32> to vector<16x128xf32>
    %180 = arith.mulf %143, %179 : vector<16x128xf32>
    %181 = vector.extract_strided_slice %3 {offsets = [5, 0], sizes = [1, 128], strides = [1, 1]} : vector<9x128xf32> to vector<1x128xf32>
    %182 = vector.broadcast %181 : vector<1x128xf32> to vector<16x128xf32>
    %183 = arith.mulf %146, %182 : vector<16x128xf32>
    %184 = arith.addf %180, %183 : vector<16x128xf32>
    %185 = vector.extract_strided_slice %3 {offsets = [8, 0], sizes = [1, 128], strides = [1, 1]} : vector<9x128xf32> to vector<1x128xf32>
    %186 = vector.broadcast %185 : vector<1x128xf32> to vector<16x128xf32>
    %187 = arith.mulf %149, %186 : vector<16x128xf32>
    %188 = arith.addf %184, %187 : vector<16x128xf32>
    %c0_42 = arith.constant 0 : index
    %c10 = arith.constant 10 : index
    %c0_43 = arith.constant 0 : index
    %c0_44 = arith.constant 0 : index
    %189 = vector.load %arg7[%c0_42, %c10, %c0_43, %c0_44] : memref<1x16x16x128xf32, #tpu.memory_space<vmem>>, vector<1x1x16x128xf32>
    %190 = vector.shape_cast %189 : vector<1x1x16x128xf32> to vector<16x128xf32>
    %191 = vector.shape_cast %188 : vector<16x128xf32> to vector<1x1x16x128xf32>
    tpu.vector_store %arg7[%c0_42, %c10, %c0_43, %c0_44], %191 {strides = array<i32>} : memref<1x16x16x128xf32, #tpu.memory_space<vmem>>, vector<1x1x16x128xf32>,
    %192 = arith.mulf %143, %12 : vector<16x128xf32>
    %193 = arith.mulf %146, %17 : vector<16x128xf32>
    %194 = arith.addf %192, %193 : vector<16x128xf32>
    %195 = arith.mulf %149, %22 : vector<16x128xf32>
    %196 = arith.addf %194, %195 : vector<16x128xf32>
    %c0_45 = arith.constant 0 : index
    %c11 = arith.constant 11 : index
    %c0_46 = arith.constant 0 : index
    %c0_47 = arith.constant 0 : index
    %197 = vector.load %arg7[%c0_45, %c11, %c0_46, %c0_47] : memref<1x16x16x128xf32, #tpu.memory_space<vmem>>, vector<1x1x16x128xf32>
    %198 = vector.shape_cast %197 : vector<1x1x16x128xf32> to vector<16x128xf32>
    %199 = vector.shape_cast %196 : vector<16x128xf32> to vector<1x1x16x128xf32>
    tpu.vector_store %arg7[%c0_45, %c11, %c0_46, %c0_47], %199 {strides = array<i32>} : memref<1x16x16x128xf32, #tpu.memory_space<vmem>>, vector<1x1x16x128xf32>,
    %cst = arith.constant 0.000000e+00 : f32
    %200 = vector.broadcast %cst : f32 to vector<16x128xf32>
    %c0_48 = arith.constant 0 : index
    %c12 = arith.constant 12 : index
    %c0_49 = arith.constant 0 : index
    %c0_50 = arith.constant 0 : index
    %201 = vector.load %arg7[%c0_48, %c12, %c0_49, %c0_50] : memref<1x16x16x128xf32, #tpu.memory_space<vmem>>, vector<1x1x16x128xf32>
    %202 = vector.shape_cast %201 : vector<1x1x16x128xf32> to vector<16x128xf32>
    %203 = vector.shape_cast %200 : vector<16x128xf32> to vector<1x1x16x128xf32>
    tpu.vector_store %arg7[%c0_48, %c12, %c0_49, %c0_50], %203 {strides = array<i32>} : memref<1x16x16x128xf32, #tpu.memory_space<vmem>>, vector<1x1x16x128xf32>,
    %c0_51 = arith.constant 0 : index
    %c13 = arith.constant 13 : index
    %c0_52 = arith.constant 0 : index
    %c0_53 = arith.constant 0 : index
    %204 = vector.load %arg7[%c0_51, %c13, %c0_52, %c0_53] : memref<1x16x16x128xf32, #tpu.memory_space<vmem>>, vector<1x1x16x128xf32>
    %205 = vector.shape_cast %204 : vector<1x1x16x128xf32> to vector<16x128xf32>
    %206 = vector.shape_cast %200 : vector<16x128xf32> to vector<1x1x16x128xf32>
    tpu.vector_store %arg7[%c0_51, %c13, %c0_52, %c0_53], %206 {strides = array<i32>} : memref<1x16x16x128xf32, #tpu.memory_space<vmem>>, vector<1x1x16x128xf32>,
    %c0_54 = arith.constant 0 : index
    %c14 = arith.constant 14 : index
    %c0_55 = arith.constant 0 : index
    %c0_56 = arith.constant 0 : index
    %207 = vector.load %arg7[%c0_54, %c14, %c0_55, %c0_56] : memref<1x16x16x128xf32, #tpu.memory_space<vmem>>, vector<1x1x16x128xf32>
    %208 = vector.shape_cast %207 : vector<1x1x16x128xf32> to vector<16x128xf32>
    %209 = vector.shape_cast %200 : vector<16x128xf32> to vector<1x1x16x128xf32>
    tpu.vector_store %arg7[%c0_54, %c14, %c0_55, %c0_56], %209 {strides = array<i32>} : memref<1x16x16x128xf32, #tpu.memory_space<vmem>>, vector<1x1x16x128xf32>,
    %cst_57 = arith.constant 1.000000e+00 : f32
    %210 = vector.broadcast %cst_57 : f32 to vector<16x128xf32>
    %c0_58 = arith.constant 0 : index
    %c15 = arith.constant 15 : index
    %c0_59 = arith.constant 0 : index
    %c0_60 = arith.constant 0 : index
    %211 = vector.load %arg7[%c0_58, %c15, %c0_59, %c0_60] : memref<1x16x16x128xf32, #tpu.memory_space<vmem>>, vector<1x1x16x128xf32>
    %212 = vector.shape_cast %211 : vector<1x1x16x128xf32> to vector<16x128xf32>
    %213 = vector.shape_cast %210 : vector<16x128xf32> to vector<1x1x16x128xf32>
    tpu.vector_store %arg7[%c0_58, %c15, %c0_59, %c0_60], %213 {strides = array<i32>} : memref<1x16x16x128xf32, #tpu.memory_space<vmem>>, vector<1x1x16x128xf32>,
    return
  }
  func.func @transform_0(%arg0: i32, %arg1: i32, %arg2: i32) -> (i32, i32, i32) {
    %c0_i32 = arith.constant 0 : i32
    %c0_i32_0 = arith.constant 0 : i32
    return %arg0, %arg1, %c0_i32 : i32, i32, i32
  }
  func.func @transform_1(%arg0: i32, %arg1: i32, %arg2: i32) -> (i32, i32, i32) {
    %c0_i32 = arith.constant 0 : i32
    %c0_i32_0 = arith.constant 0 : i32
    return %arg0, %c0_i32, %arg2 : i32, i32, i32
  }
  func.func @transform_2(%arg0: i32, %arg1: i32, %arg2: i32) -> (i32, i32, i32) {
    %c0_i32 = arith.constant 0 : i32
    %c0_i32_0 = arith.constant 0 : i32
    return %arg0, %arg1, %c0_i32 : i32, i32, i32
  }
  func.func @transform_3(%arg0: i32, %arg1: i32, %arg2: i32) -> (i32, i32, i32) {
    %c0_i32 = arith.constant 0 : i32
    %c0_i32_0 = arith.constant 0 : i32
    return %arg0, %c0_i32, %arg2 : i32, i32, i32
  }
  func.func @transform_4(%arg0: i32, %arg1: i32, %arg2: i32) -> (i32, i32, i32, i32) {
    %c0_i32 = arith.constant 0 : i32
    %c0_i32_0 = arith.constant 0 : i32
    return %arg0, %c0_i32, %arg1, %arg2 : i32, i32, i32, i32
  }
}

</mosaic_0001>

<llo_original>
// kernel: relative_frame_transformation.1
$region0: #{relative_frame_transformation.1}
  #allocation0 [shape = 'u32[]', space=smem, size = 0x4, offset = 0x4, fixed_abs, tag = 'smem constant byte address 0x4 - core index']
  #allocation1 [shape = 'u32[144,128]{1,0:T(1,128)}', space=vmem, size = 0x12000, scoped, tag = 'internal scratch']
  %s0 = inlined_call_operand.vmem [shape: f32[2,16,9], index: 0, kind: input, shape index: {}]
  %s1 = inlined_call_operand.vmem [shape: f32[2,9,128], index: 1, kind: input, shape index: {}]
  %s2 = inlined_call_operand.vmem [shape: f32[2,16,3], index: 2, kind: input, shape index: {}]
  %s3 = inlined_call_operand.vmem [shape: f32[2,3,128], index: 3, kind: input, shape index: {}]
  %s4 = inlined_call_operand.vmem [shape: f32[2,16,16,128], index: 4, kind: output, shape index: {}]
  %s5 = sld [smem:[#allocation0]]
  $region49: #{relative_frame_transformation.1} parent=0
    _
  %s7 = ssub.s32 1, %s5
  %s8 = scalar_select 0, %s7, %s5
  loop: start=0, step=1, limit=4
  $region2: #{relative_frame_transformation.1} parent=0 // loop_pre_header
    _
  $region3: #{relative_frame_transformation.1} parent=0 // loop_header
    %s10 = sphi 0, %s14
    %p11 = scmp.ge.s32.totalorder %s10, 4
    %s17 = sphi 0, %s36
    %s18 = sphi 0, %s32
    %s19 = sphi 0, %s28
    %s20 = sphi 0, %s17
    %s21 = sphi 0, %s18
    %s22 = sphi 0, %s19
    %s23 = sphi 0, %s20
    %s24 = sphi 0, %s21
    %s25 = sphi 0, %s22
    %s41 = sphi 0, %s43
    %s44 = sphi 0, %s41
    %s45 = sphi 0, %s44
    %s61 = sphi 0, %s45
    %s69 = sphi 0, %s71
    %s72 = sphi 0, %s69
    %s73 = sphi 0, %s72
    %s89 = sphi 0, %s73
    %s97 = sphi 0, %s99
    %s100 = sphi 0, %s97
    %s101 = sphi 0, %s100
    %s117 = sphi 0, %s101
    %s125 = sphi 0, %s127
    %s128 = sphi 0, %s125
    %s129 = sphi 0, %s128
    %s145 = sphi 0, %s129
    %s155 = sphi 0, %s157
    %s158 = sphi 0, %s155
    %s159 = sphi 0, %s158
    %s175 = sphi 0, %s159
  $region4: #{relative_frame_transformation.1} parent=0 // loop_header_branch
    %13 = sbr.rel (%p11) target = $region8
  $region5: #{relative_frame_transformation.1} parent=0 // loop_body
    %s15 = ssub.s32 %s10, 1
    %s16 = ssub.s32 %s10, 2
    %s26 = sadd.s32 1, %s19
    %p27 = scmp.ge.s32.totalorder %s26, 1
    %s28 = scalar_select %p27, 0, %s26
    %s29 = sadd.s32 1, %s18
    %s30 = scalar_select %p27, %s29, %s18
    %p31 = scmp.ge.s32.totalorder %s30, 1
    %s32 = scalar_select %p31, 0, %s30
    %s33 = sadd.s32 1, %s17
    %s34 = scalar_select %p31, %s33, %s17
    %p35 = scmp.ge.s32.totalorder %s34, 2
    %s36 = scalar_select %p35, 0, %s34
    %s37 = ssub.s32 %s17, %s36
    %s38 = ssub.s32 %s18, %s32
    %s39 = sor.u32 %s37, %s38
    %p40 = scmp.eq.s32.totalorder %s39, 0
    %s42 = sadd.s32 %s41, 1
    %s43 = scalar_select %p40, %s41, %s42
    %p46 = pneg %p40
    %p47 = scmp.eq.s32.totalorder %s10, 1
    %p48 = por %p46, %p47
    %p49 = scmp.ne.s32.totalorder %s41, %s44
    %p50 = scmp.eq.s32.totalorder %s10, 0
    %p51 = por %p49, %p50
    %p52 = scmp.ne.s32.totalorder %s41, %s44
    %p53 = scmp.eq.s32.totalorder %s15, 1
    %p54 = por %p52, %p53
    %p55 = scmp.ne.s32.totalorder %s44, %s45
    %p56 = scmp.eq.s32.totalorder %s15, 0
    %p57 = por %p55, %p56
    %p58 = scmp.ne.s32.totalorder %s44, %s45
    %p59 = scmp.eq.s32.totalorder %s16, 1
    %p60 = por %p58, %p59
    %p62 = scmp.ne.s32.totalorder %s45, %s61
    %p63 = scmp.eq.s32.totalorder %s16, 0
    %p64 = por %p62, %p63
    %s65 = ssub.s32 %s17, %s36
    %s66 = ssub.s32 %s19, %s28
    %s67 = sor.u32 %s65, %s66
    %p68 = scmp.eq.s32.totalorder %s67, 0
    %s70 = sadd.s32 %s69, 1
    %s71 = scalar_select %p68, %s69, %s70
    %p74 = pneg %p68
    %p75 = scmp.eq.s32.totalorder %s10, 1
    %p76 = por %p74, %p75
    %p77 = scmp.ne.s32.totalorder %s69, %s72
    %p78 = scmp.eq.s32.totalorder %s10, 0
    %p79 = por %p77, %p78
    %p80 = scmp.ne.s32.totalorder %s69, %s72
    %p81 = scmp.eq.s32.totalorder %s15, 1
    %p82 = por %p80, %p81
    %p83 = scmp.ne.s32.totalorder %s72, %s73
    %p84 = scmp.eq.s32.totalorder %s15, 0
    %p85 = por %p83, %p84
    %p86 = scmp.ne.s32.totalorder %s72, %s73
    %p87 = scmp.eq.s32.totalorder %s16, 1
    %p88 = por %p86, %p87
    %p90 = scmp.ne.s32.totalorder %s73, %s89
    %p91 = scmp.eq.s32.totalorder %s16, 0
    %p92 = por %p90, %p91
    %s93 = ssub.s32 %s17, %s36
    %s94 = ssub.s32 %s18, %s32
    %s95 = sor.u32 %s93, %s94
    %p96 = scmp.eq.s32.totalorder %s95, 0
    %s98 = sadd.s32 %s97, 1
    %s99 = scalar_select %p96, %s97, %s98
    %p102 = pneg %p96
    %p103 = scmp.eq.s32.totalorder %s10, 1
    %p104 = por %p102, %p103
    %p105 = scmp.ne.s32.totalorder %s97, %s100
    %p106 = scmp.eq.s32.totalorder %s10, 0
    %p107 = por %p105, %p106
    %p108 = scmp.ne.s32.totalorder %s97, %s100
    %p109 = scmp.eq.s32.totalorder %s15, 1
    %p110 = por %p108, %p109
    %p111 = scmp.ne.s32.totalorder %s100, %s101
    %p112 = scmp.eq.s32.totalorder %s15, 0
    %p113 = por %p111, %p112
    %p114 = scmp.ne.s32.totalorder %s100, %s101
    %p115 = scmp.eq.s32.totalorder %s16, 1
    %p116 = por %p114, %p115
    %p118 = scmp.ne.s32.totalorder %s101, %s117
    %p119 = scmp.eq.s32.totalorder %s16, 0
    %p120 = por %p118, %p119
    %s121 = ssub.s32 %s17, %s36
    %s122 = ssub.s32 %s19, %s28
    %s123 = sor.u32 %s121, %s122
    %p124 = scmp.eq.s32.totalorder %s123, 0
    %s126 = sadd.s32 %s125, 1
    %s127 = scalar_select %p124, %s125, %s126
    %p130 = pneg %p124
    %p131 = scmp.eq.s32.totalorder %s10, 1
    %p132 = por %p130, %p131
    %p133 = scmp.ne.s32.totalorder %s125, %s128
    %p134 = scmp.eq.s32.totalorder %s10, 0
    %p135 = por %p133, %p134
    %p136 = scmp.ne.s32.totalorder %s125, %s128
    %p137 = scmp.eq.s32.totalorder %s15, 1
    %p138 = por %p136, %p137
    %p139 = scmp.ne.s32.totalorder %s128, %s129
    %p140 = scmp.eq.s32.totalorder %s15, 0
    %p141 = por %p139, %p140
    %p142 = scmp.ne.s32.totalorder %s128, %s129
    %p143 = scmp.eq.s32.totalorder %s16, 1
    %p144 = por %p142, %p143
    %p146 = scmp.ne.s32.totalorder %s129, %s145
    %p147 = scmp.eq.s32.totalorder %s16, 0
    %p148 = por %p146, %p147
    %s149 = ssub.s32 %s17, %s36
    %s150 = ssub.s32 %s18, %s32
    %s151 = sor.u32 %s149, %s150
    %s152 = ssub.s32 %s19, %s28
    %s153 = sor.u32 %s151, %s152
    %p154 = scmp.eq.s32.totalorder %s153, 0
    %s156 = sadd.s32 %s155, 1
    %s157 = scalar_select %p154, %s155, %s156
    %p160 = pneg %p154
    %p161 = scmp.eq.s32.totalorder %s10, 1
    %p162 = por %p160, %p161
    %p163 = scmp.ne.s32.totalorder %s155, %s158
    %p164 = scmp.eq.s32.totalorder %s10, 0
    %p165 = por %p163, %p164
    %p166 = scmp.ne.s32.totalorder %s155, %s158
    %p167 = scmp.eq.s32.totalorder %s15, 1
    %p168 = por %p166, %p167
    %p169 = scmp.ne.s32.totalorder %s158, %s159
    %p170 = scmp.eq.s32.totalorder %s15, 0
    %p171 = por %p169, %p170
    %p172 = scmp.ne.s32.totalorder %s158, %s159
    %p173 = scmp.eq.s32.totalorder %s16, 1
    %p174 = por %p172, %p173
    %p176 = scmp.ne.s32.totalorder %s159, %s175
    %p177 = scmp.eq.s32.totalorder %s16, 0
    %p178 = por %p176, %p177
    %p179 = scmp.le.s32.totalorder 1, %s10
    %p180 = scmp.lt.s32.totalorder %s10, 3
    %p181 = pnand %p179, %p180
    %p182 = pneg %p181
    // Predicated region
    $region9: #{relative_frame_transformation.1} parent=5 // pred_check
      _
    $region10: #{relative_frame_transformation.1} parent=5 // pred_check_branch
      %184 = sbr.rel (%p181) target = $region12
    $region11: #{relative_frame_transformation.1} parent=5 // pred_region
      %s185 = ssub.s32 %s10, 1
    $region12: #{relative_frame_transformation.1} parent=5 // pred_fallthru
      _
    %p186 = scmp.lt.s32.totalorder %s10, 2
    // Predicated region
    $region13: #{relative_frame_transformation.1} parent=5 // pred_check
      %p187 = pneg %p186
    $region14: #{relative_frame_transformation.1} parent=5 // pred_check_branch
      %189 = sbr.rel (%p187) target = $region16
    $region15: #{relative_frame_transformation.1} parent=5 // pred_region
      // Predicated region
      $region17: #{relative_frame_transformation.1} parent=15 // pred_check
        %p190 = pneg %p51
      $region18: #{relative_frame_transformation.1} parent=15 // pred_check_branch
        %192 = sbr.rel (%p190) target = $region20
      $region19: #{relative_frame_transformation.1} parent=15 // pred_region
        %s193 = smul.u32 2, %s18
        %p194 = scmp.lt.s32.totalorder %s17, 1
        %s195 = scalar_select %p194, %s17, 1
        %p196 = scmp.lt.s32.totalorder %s193, 1
        %s197 = scalar_select %p196, %s193, 1
        %s198 = smul.addr %s195, 2
        %s199 = sadd.s32 %s197, %s198
        %s200 = smul.addr %s199, 8
        %s201 = scalar_lea.vmem %s0, %s200
        %s202 = smul.u32 2, %s18
      $region20: #{relative_frame_transformation.1} parent=15 // pred_fallthru
        _
      // Predicated region
      $region21: #{relative_frame_transformation.1} parent=15 // pred_check
        %p203 = pneg %p79
      $region22: #{relative_frame_transformation.1} parent=15 // pred_check_branch
        %205 = sbr.rel (%p203) target = $region24
      $region23: #{relative_frame_transformation.1} parent=15 // pred_region
        %p206 = scmp.lt.s32.totalorder %s17, 1
        %s207 = scalar_select %p206, %s17, 1
        %p208 = scmp.lt.s32.totalorder %s19, 0
        %s209 = scalar_select %p208, %s19, 0
        %s210 = smul.addr %s207, 2
        %s211 = sadd.s32 %s209, %s210
        %s212 = smul.addr %s211, 8
        %s213 = scalar_lea.vmem %s1, %s212
      $region24: #{relative_frame_transformation.1} parent=15 // pred_fallthru
        _
      // Predicated region
      $region25: #{relative_frame_transformation.1} parent=15 // pred_check
        %p214 = pneg %p107
      $region26: #{relative_frame_transformation.1} parent=15 // pred_check_branch
        %216 = sbr.rel (%p214) target = $region28
      $region27: #{relative_frame_transformation.1} parent=15 // pred_region
        %s217 = smul.u32 2, %s18
        %p218 = scmp.lt.s32.totalorder %s17, 1
        %s219 = scalar_select %p218, %s17, 1
        %p220 = scmp.lt.s32.totalorder %s217, 1
        %s221 = scalar_select %p220, %s217, 1
        %s222 = smul.addr %s219, 2
        %s223 = sadd.s32 %s221, %s222
        %s224 = smul.addr %s223, 8
        %s225 = scalar_lea.vmem %s2, %s224
        %s226 = smul.u32 2, %s18
      $region28: #{relative_frame_transformation.1} parent=15 // pred_fallthru
        _
      // Predicated region
      $region29: #{relative_frame_transformation.1} parent=15 // pred_check
        %p227 = pneg %p135
      $region30: #{relative_frame_transformation.1} parent=15 // pred_check_branch
        %229 = sbr.rel (%p227) target = $region32
      $region31: #{relative_frame_transformation.1} parent=15 // pred_region
        %p230 = scmp.lt.s32.totalorder %s17, 1
        %s231 = scalar_select %p230, %s17, 1
        %p232 = scmp.lt.s32.totalorder %s19, 0
        %s233 = scalar_select %p232, %s19, 0
        %s234 = sadd.s32 %s233, %s231
        %s235 = smul.addr %s234, 4
        %s236 = scalar_lea.vmem %s3, %s235
      $region32: #{relative_frame_transformation.1} parent=15 // pred_fallthru
        _
    $region16: #{relative_frame_transformation.1} parent=5 // pred_fallthru
      _
    %p237 = scmp.le.s32.totalorder 1, %s10
    %p238 = scmp.lt.s32.totalorder %s10, 3
    %p239 = pnand %p237, %p238
    %p240 = pneg %p239
    // Predicated region
    $region33: #{relative_frame_transformation.1} parent=5 // pred_check
      _
    $region34: #{relative_frame_transformation.1} parent=5 // pred_check_branch
      %242 = sbr.rel (%p239) target = $region36
    $region35: #{relative_frame_transformation.1} parent=5 // pred_region
      %s243 = ssub.s32 %s10, 1
      %s244 = smul.u32 2, %s21
      %p245 = scmp.lt.s32.totalorder %s20, 1
      %s246 = scalar_select %p245, %s20, 1
      %p247 = scmp.lt.s32.totalorder %s244, 1
      %s248 = scalar_select %p247, %s244, 1
      %s249 = smul.addr %s246, 2
      %s250 = sadd.s32 %s248, %s249
      %s251 = smul.addr %s250, 8
      %s252 = scalar_lea.vmem %s0, %s251
      %p253 = pneg %p57
      %p254 = pneg %p54
      %p255 = scmp.lt.s32.totalorder %s20, 1
      %s256 = scalar_select %p255, %s20, 1
      %p257 = scmp.lt.s32.totalorder %s22, 0
      %s258 = scalar_select %p257, %s22, 0
      %s259 = smul.addr %s256, 2
      %s260 = sadd.s32 %s258, %s259
      %s261 = smul.addr %s260, 8
      %s262 = scalar_lea.vmem %s1, %s261
      %p263 = pneg %p85
      %p264 = pneg %p82
      %s265 = smul.u32 2, %s21
      %p266 = scmp.lt.s32.totalorder %s20, 1
      %s267 = scalar_select %p266, %s20, 1
      %p268 = scmp.lt.s32.totalorder %s265, 1
      %s269 = scalar_select %p268, %s265, 1
      %s270 = smul.addr %s267, 2
      %s271 = sadd.s32 %s269, %s270
      %s272 = smul.addr %s271, 8
      %s273 = scalar_lea.vmem %s2, %s272
      %p274 = pneg %p113
      %p275 = pneg %p110
      %p276 = scmp.lt.s32.totalorder %s20, 1
      %s277 = scalar_select %p276, %s20, 1
      %p278 = scmp.lt.s32.totalorder %s22, 0
      %s279 = scalar_select %p278, %s22, 0
      %s280 = sadd.s32 %s279, %s277
      %s281 = smul.addr %s280, 4
      %s282 = scalar_lea.vmem %s3, %s281
      %p283 = pneg %p141
      %p284 = pneg %p138
      %p285 = pneg %p171
      %p286 = pneg %p168
      %s287 = smul.u32 2, %s21
      %p288 = scmp.lt.s32.totalorder %s20, 1
      %s289 = scalar_select %p288, %s20, 1
      %p290 = scmp.lt.s32.totalorder %s287, 1
      %s291 = scalar_select %p290, %s287, 1
      %p292 = scmp.lt.s32.totalorder %s22, 0
      %s293 = scalar_select %p292, %s22, 0
      %s294 = sadd.s32 %s293, %s291
      %s295 = smul.addr %s289, 32
      %s296 = sadd.s32 %s294, %s295
      %s297 = smul.addr %s296, 8
      %s298 = scalar_lea.vmem %s4, %s297
      %s299 = smul.u32 2, %s21
      %p300 = scmp.lt.s32.totalorder %s20, 1
      %s301 = scalar_select %p300, %s20, 1
      %p302 = scmp.lt.s32.totalorder %s299, 1
      %s303 = scalar_select %p302, %s299, 1
      %s304 = smul.addr %s301, 2
      %s305 = sadd.s32 %s303, %s304
      %s306 = smul.addr %s305, 8
      %s307 = scalar_lea.vmem %s0, %s306
      %s308 = smul.u32 2, %s21
      %p309 = scmp.lt.s32.totalorder %s20, 1
      %s310 = scalar_select %p309, %s20, 1
      %p311 = scmp.lt.s32.totalorder %s22, 0
      %s312 = scalar_select %p311, %s22, 0
      %s313 = smul.addr %s310, 2
      %s314 = sadd.s32 %s312, %s313
      %s315 = smul.addr %s314, 8
      %s316 = scalar_lea.vmem %s1, %s315
      %s317 = smul.u32 2, %s21
      %p318 = scmp.lt.s32.totalorder %s20, 1
      %s319 = scalar_select %p318, %s20, 1
      %p320 = scmp.lt.s32.totalorder %s317, 1
      %s321 = scalar_select %p320, %s317, 1
      %s322 = smul.addr %s319, 2
      %s323 = sadd.s32 %s321, %s322
      %s324 = smul.addr %s323, 8
      %s325 = scalar_lea.vmem %s2, %s324
      %s326 = smul.u32 2, %s21
      %p327 = scmp.lt.s32.totalorder %s20, 1
      %s328 = scalar_select %p327, %s20, 1
      %p329 = scmp.lt.s32.totalorder %s22, 0
      %s330 = scalar_select %p329, %s22, 0
      %s331 = sadd.s32 %s330, %s328
      %s332 = smul.addr %s331, 4
      %s333 = scalar_lea.vmem %s3, %s332
      %s334 = smul.u32 2, %s21
      %p335 = scmp.lt.s32.totalorder %s20, 1
      %s336 = scalar_select %p335, %s20, 1
      %p337 = scmp.lt.s32.totalorder %s334, 1
      %s338 = scalar_select %p337, %s334, 1
      %p339 = scmp.lt.s32.totalorder %s22, 0
      %s340 = scalar_select %p339, %s22, 0
      %s341 = sadd.s32 %s340, %s338
      %s342 = smul.addr %s336, 32
      %s343 = sadd.s32 %s341, %s342
      %s344 = smul.addr %s343, 8
      %s345 = scalar_lea.vmem %s4, %s344
      %s346 = smul.u32 2, %s21
      %v347 = vld [vmem:[%s307] sm:$0xff]
      %v348 = vld [vmem:[%s307 + $0x8] sm:$0xff]
      %v349 = vld [vmem:[%s316] sm:$0xff]
      %v350 = vld [vmem:[%s316 + $0x8] sm:$0x1]
      %v351 = vld [vmem:[%s325] sm:$0xff]
      %v352 = vld [vmem:[%s325 + $0x8] sm:$0xff]
      %v353 = vld [vmem:[%s333] sm:$0x7]
      %v354 = vlaneseq
      %v355 = vshrl.u32 %v354, 7
      %v356 = vsub.s32 0, %v355
      %v357 = vrot.slane %v353, %v356
      %359 = vset.pattern.permute.xlu0 0
      %360 = vperm.xlu0 %359, %v351
      %v361 = vpop.permute.xlu0 %360
      %364 = vset.pattern.permute.xlu0 0
      %365 = vperm.xlu0 %364, %v352
      %v366 = vpop.permute.xlu0 %365
      %v368 = vsub.f32 %v357, %v361
      %v369 = vsub.f32 %v357, %v366
      %v370 = vlaneseq
      %v371 = vshrl.u32 %v370, 7
      %v372 = vsub.s32 1, %v371
      %v373 = vrot.slane %v353, %v372
      %374 = vset.pattern.permute.xlu0 1
      %375 = vperm.xlu0 %374, %v351
      %v376 = vpop.permute.xlu0 %375
      %378 = vset.pattern.permute.xlu0 1
      %379 = vperm.xlu0 %378, %v352
      %v380 = vpop.permute.xlu0 %379
      %v382 = vsub.f32 %v373, %v376
      %v383 = vsub.f32 %v373, %v380
      %v384 = vlaneseq
      %v385 = vshrl.u32 %v384, 7
      %v386 = vsub.s32 2, %v385
      %v387 = vrot.slane %v353, %v386
      %388 = vset.pattern.permute.xlu0 2
      %389 = vperm.xlu0 %388, %v351
      %v390 = vpop.permute.xlu0 %389
      %392 = vset.pattern.permute.xlu0 2
      %393 = vperm.xlu0 %392, %v352
      %v394 = vpop.permute.xlu0 %393
      %v396 = vsub.f32 %v387, %v390
      %v397 = vsub.f32 %v387, %v394
      %399 = vset.pattern.permute.xlu0 0
      %400 = vperm.xlu0 %399, %v347
      %v401 = vpop.permute.xlu0 %400
      %404 = vset.pattern.permute.xlu0 0
      %405 = vperm.xlu0 %404, %v348
      %v406 = vpop.permute.xlu0 %405
      %408 = vset.pattern.permute.xlu0 3
      %409 = vperm.xlu0 %408, %v347
      %v410 = vpop.permute.xlu0 %409
      %412 = vset.pattern.permute.xlu0 3
      %413 = vperm.xlu0 %412, %v348
      %v414 = vpop.permute.xlu0 %413
      %416 = vset.pattern.permute.xlu0 6
      %417 = vperm.xlu0 %416, %v347
      %v418 = vpop.permute.xlu0 %417
      %420 = vset.pattern.permute.xlu0 6
      %421 = vperm.xlu0 %420, %v348
      %v422 = vpop.permute.xlu0 %421
      %v424 = vlaneseq
      %v425 = vshrl.u32 %v424, 7
      %v426 = vsub.s32 0, %v425
      %v427 = vrot.slane %v349, %v426
      %v428 = vmul.f32 %v401, %v427
      %v429 = vmul.f32 %v406, %v427
      %v430 = vlaneseq
      %v431 = vshrl.u32 %v430, 7
      %v432 = vsub.s32 3, %v431
      %v433 = vrot.slane %v349, %v432
      %v434 = vmul.f32 %v410, %v433
      %v435 = vmul.f32 %v414, %v433
      %v436 = vadd.f32 %v428, %v434
      %v437 = vadd.f32 %v429, %v435
      %v438 = vlaneseq
      %v439 = vshrl.u32 %v438, 7
      %v440 = vsub.s32 6, %v439
      %v441 = vrot.slane %v349, %v440
      %v442 = vmul.f32 %v418, %v441
      %v443 = vmul.f32 %v422, %v441
      %v444 = vadd.f32 %v436, %v442
      %v445 = vadd.f32 %v437, %v443
      %446 = vst [vmem:[%s345] sm:$0xff] %v444
      %447 = vst [vmem:[%s345 + $0x8] sm:$0xff] %v445
      %v448 = vlaneseq
      %v449 = vshrl.u32 %v448, 7
      %v450 = vsub.s32 1, %v449
      %v451 = vrot.slane %v349, %v450
      %v452 = vmul.f32 %v401, %v451
      %v453 = vmul.f32 %v406, %v451
      %v454 = vlaneseq
      %v455 = vshrl.u32 %v454, 7
      %v456 = vsub.s32 4, %v455
      %v457 = vrot.slane %v349, %v456
      %v458 = vmul.f32 %v410, %v457
      %v459 = vmul.f32 %v414, %v457
      %v460 = vadd.f32 %v452, %v458
      %v461 = vadd.f32 %v453, %v459
      %v462 = vlaneseq
      %v463 = vshrl.u32 %v462, 7
      %v464 = vsub.s32 7, %v463
      %v465 = vrot.slane %v349, %v464
      %v466 = vmul.f32 %v418, %v465
      %v467 = vmul.f32 %v422, %v465
      %v468 = vadd.f32 %v460, %v466
      %v469 = vadd.f32 %v461, %v467
      %s470 = scalar_lea.vmem %s345, 16
      %471 = vst [vmem:[%s470] sm:$0xff] %v468
      %472 = vst [vmem:[%s470 + $0x8] sm:$0xff] %v469
      %v473 = vlaneseq
      %v474 = vshrl.u32 %v473, 7
      %v475 = vsub.s32 2, %v474
      %v476 = vrot.slane %v349, %v475
      %v477 = vmul.f32 %v401, %v476
      %v478 = vmul.f32 %v406, %v476
      %v479 = vlaneseq
      %v480 = vshrl.u32 %v479, 7
      %v481 = vsub.s32 5, %v480
      %v482 = vrot.slane %v349, %v481
      %v483 = vmul.f32 %v410, %v482
      %v484 = vmul.f32 %v414, %v482
      %v485 = vadd.f32 %v477, %v483
      %v486 = vadd.f32 %v478, %v484
      %v487 = vlaneseq
      %v488 = vshrl.u32 %v487, 7
      %v489 = vsub.s32 0, %v488
      %v490 = vrot.slane %v350, %v489
      %v491 = vmul.f32 %v418, %v490
      %v492 = vmul.f32 %v422, %v490
      %v493 = vadd.f32 %v485, %v491
      %v494 = vadd.f32 %v486, %v492
      %s495 = scalar_lea.vmem %s345, 32
      %496 = vst [vmem:[%s495] sm:$0xff] %v493
      %497 = vst [vmem:[%s495 + $0x8] sm:$0xff] %v494
      %v498 = vmul.f32 %v401, %v368
      %v499 = vmul.f32 %v406, %v369
      %v500 = vmul.f32 %v410, %v382
      %v501 = vmul.f32 %v414, %v383
      %v502 = vadd.f32 %v498, %v500
      %v503 = vadd.f32 %v499, %v501
      %v504 = vmul.f32 %v418, %v396
      %v505 = vmul.f32 %v422, %v397
      %v506 = vadd.f32 %v502, %v504
      %v507 = vadd.f32 %v503, %v505
      %s508 = scalar_lea.vmem %s345, 48
      %509 = vst [vmem:[%s508] sm:$0xff] %v506
      %510 = vst [vmem:[%s508 + $0x8] sm:$0xff] %v507
      %511 = vset.pattern.permute.xlu0 1
      %512 = vperm.xlu0 %511, %v347
      %v513 = vpop.permute.xlu0 %512
      %515 = vset.pattern.permute.xlu0 1
      %516 = vperm.xlu0 %515, %v348
      %v517 = vpop.permute.xlu0 %516
      %519 = vset.pattern.permute.xlu0 4
      %520 = vperm.xlu0 %519, %v347
      %v521 = vpop.permute.xlu0 %520
      %523 = vset.pattern.permute.xlu0 4
      %524 = vperm.xlu0 %523, %v348
      %v525 = vpop.permute.xlu0 %524
      %527 = vset.pattern.permute.xlu0 7
      %528 = vperm.xlu0 %527, %v347
      %v529 = vpop.permute.xlu0 %528
      %531 = vset.pattern.permute.xlu0 7
      %532 = vperm.xlu0 %531, %v348
      %v533 = vpop.permute.xlu0 %532
      %v535 = vmul.f32 %v513, %v427
      %v536 = vmul.f32 %v517, %v427
      %v537 = vmul.f32 %v521, %v433
      %v538 = vmul.f32 %v525, %v433
      %v539 = vadd.f32 %v535, %v537
      %v540 = vadd.f32 %v536, %v538
      %v541 = vmul.f32 %v529, %v441
      %v542 = vmul.f32 %v533, %v441
      %v543 = vadd.f32 %v539, %v541
      %v544 = vadd.f32 %v540, %v542
      %s545 = scalar_lea.vmem %s345, 64
      %546 = vst [vmem:[%s545] sm:$0xff] %v543
      %547 = vst [vmem:[%s545 + $0x8] sm:$0xff] %v544
      %v548 = vmul.f32 %v513, %v451
      %v549 = vmul.f32 %v517, %v451
      %v550 = vmul.f32 %v521, %v457
      %v551 = vmul.f32 %v525, %v457
      %v552 = vadd.f32 %v548, %v550
      %v553 = vadd.f32 %v549, %v551
      %v554 = vmul.f32 %v529, %v465
      %v555 = vmul.f32 %v533, %v465
      %v556 = vadd.f32 %v552, %v554
      %v557 = vadd.f32 %v553, %v555
      %s558 = scalar_lea.vmem %s345, 80
      %559 = vst [vmem:[%s558] sm:$0xff] %v556
      %560 = vst [vmem:[%s558 + $0x8] sm:$0xff] %v557
      %v561 = vmul.f32 %v513, %v476
      %v562 = vmul.f32 %v517, %v476
      %v563 = vmul.f32 %v521, %v482
      %v564 = vmul.f32 %v525, %v482
      %v565 = vadd.f32 %v561, %v563
      %v566 = vadd.f32 %v562, %v564
      %v567 = vmul.f32 %v529, %v490
      %v568 = vmul.f32 %v533, %v490
      %v569 = vadd.f32 %v565, %v567
      %v570 = vadd.f32 %v566, %v568
      %s571 = scalar_lea.vmem %s345, 96
      %572 = vst [vmem:[%s571] sm:$0xff] %v569
      %573 = vst [vmem:[%s571 + $0x8] sm:$0xff] %v570
      %v574 = vmul.f32 %v513, %v368
      %v575 = vmul.f32 %v517, %v369
      %v576 = vmul.f32 %v521, %v382
      %v577 = vmul.f32 %v525, %v383
      %v578 = vadd.f32 %v574, %v576
      %v579 = vadd.f32 %v575, %v577
      %v580 = vmul.f32 %v529, %v396
      %v581 = vmul.f32 %v533, %v397
      %v582 = vadd.f32 %v578, %v580
      %v583 = vadd.f32 %v579, %v581
      %s584 = scalar_lea.vmem %s345, 112
      %585 = vst [vmem:[%s584] sm:$0xff] %v582
      %586 = vst [vmem:[%s584 + $0x8] sm:$0xff] %v583
      %587 = vset.pattern.permute.xlu0 2
      %588 = vperm.xlu0 %587, %v347
      %v589 = vpop.permute.xlu0 %588
      %591 = vset.pattern.permute.xlu0 2
      %592 = vperm.xlu0 %591, %v348
      %v593 = vpop.permute.xlu0 %592
      %595 = vset.pattern.permute.xlu0 5
      %596 = vperm.xlu0 %595, %v347
      %v597 = vpop.permute.xlu0 %596
      %599 = vset.pattern.permute.xlu0 5
      %600 = vperm.xlu0 %599, %v348
      %v601 = vpop.permute.xlu0 %600
      %603 = vset.pattern.permute.xlu0 8
      %604 = vperm.xlu0 %603, %v347
      %v605 = vpop.permute.xlu0 %604
      %607 = vset.pattern.permute.xlu0 8
      %608 = vperm.xlu0 %607, %v348
      %v609 = vpop.permute.xlu0 %608
      %v611 = vmul.f32 %v589, %v427
      %v612 = vmul.f32 %v593, %v427
      %v613 = vmul.f32 %v597, %v433
      %v614 = vmul.f32 %v601, %v433
      %v615 = vadd.f32 %v611, %v613
      %v616 = vadd.f32 %v612, %v614
      %v617 = vmul.f32 %v605, %v441
      %v618 = vmul.f32 %v609, %v441
      %v619 = vadd.f32 %v615, %v617
      %v620 = vadd.f32 %v616, %v618
      %s621 = scalar_lea.vmem %s345, 128
      %622 = vst [vmem:[%s621] sm:$0xff] %v619
      %623 = vst [vmem:[%s621 + $0x8] sm:$0xff] %v620
      %v624 = vmul.f32 %v589, %v451
      %v625 = vmul.f32 %v593, %v451
      %v626 = vmul.f32 %v597, %v457
      %v627 = vmul.f32 %v601, %v457
      %v628 = vadd.f32 %v624, %v626
      %v629 = vadd.f32 %v625, %v627
      %v630 = vmul.f32 %v605, %v465
      %v631 = vmul.f32 %v609, %v465
      %v632 = vadd.f32 %v628, %v630
      %v633 = vadd.f32 %v629, %v631
      %s634 = scalar_lea.vmem %s345, 144
      %635 = vst [vmem:[%s634] sm:$0xff] %v632
      %636 = vst [vmem:[%s634 + $0x8] sm:$0xff] %v633
      %v637 = vmul.f32 %v589, %v476
      %v638 = vmul.f32 %v593, %v476
      %v639 = vmul.f32 %v597, %v482
      %v640 = vmul.f32 %v601, %v482
      %v641 = vadd.f32 %v637, %v639
      %v642 = vadd.f32 %v638, %v640
      %v643 = vmul.f32 %v605, %v490
      %v644 = vmul.f32 %v609, %v490
      %v645 = vadd.f32 %v641, %v643
      %v646 = vadd.f32 %v642, %v644
      %s647 = scalar_lea.vmem %s345, 160
      %648 = vst [vmem:[%s647] sm:$0xff] %v645
      %649 = vst [vmem:[%s647 + $0x8] sm:$0xff] %v646
      %v650 = vmul.f32 %v589, %v368
      %v651 = vmul.f32 %v593, %v369
      %v652 = vmul.f32 %v597, %v382
      %v653 = vmul.f32 %v601, %v383
      %v654 = vadd.f32 %v650, %v652
      %v655 = vadd.f32 %v651, %v653
      %v656 = vmul.f32 %v605, %v396
      %v657 = vmul.f32 %v609, %v397
      %v658 = vadd.f32 %v654, %v656
      %v659 = vadd.f32 %v655, %v657
      %s660 = scalar_lea.vmem %s345, 176
      %661 = vst [vmem:[%s660] sm:$0xff] %v658
      %662 = vst [vmem:[%s660 + $0x8] sm:$0xff] %v659
      %s663 = scalar_lea.vmem %s345, 192
      %664 = vst [vmem:[%s663] sm:$0xff] 0.0
      %665 = vst [vmem:[%s663 + $0x8] sm:$0xff] 0.0
      %s666 = scalar_lea.vmem %s345, 208
      %667 = vst [vmem:[%s666] sm:$0xff] 0.0
      %668 = vst [vmem:[%s666 + $0x8] sm:$0xff] 0.0
      %s669 = scalar_lea.vmem %s345, 224
      %670 = vst [vmem:[%s669] sm:$0xff] 0.0
      %671 = vst [vmem:[%s669 + $0x8] sm:$0xff] 0.0
      %s672 = scalar_lea.vmem %s345, 240
      %673 = vst [vmem:[%s672] sm:$0xff] 1.0
      %674 = vst [vmem:[%s672 + $0x8] sm:$0xff] 1.0
      %s675 = smul.u32 2, %s21
      %p676 = scmp.lt.s32.totalorder %s20, 1
      %s677 = scalar_select %p676, %s20, 1
      %p678 = scmp.lt.s32.totalorder %s675, 1
      %s679 = scalar_select %p678, %s675, 1
      %p680 = scmp.lt.s32.totalorder %s22, 0
      %s681 = scalar_select %p680, %s22, 0
      %s682 = sadd.s32 %s681, %s679
      %s683 = smul.addr %s677, 32
      %s684 = sadd.s32 %s682, %s683
      %s685 = smul.addr %s684, 8
      %s686 = scalar_lea.vmem %s4, %s685
      // Predicated region
      $region37: #{relative_frame_transformation.1} parent=35 // pred_check
        %p687 = pneg %p168
      $region38: #{relative_frame_transformation.1} parent=35 // pred_check_branch
        %689 = sbr.rel (%p687) target = $region40
      $region39: #{relative_frame_transformation.1} parent=35 // pred_region
        %s690 = smul.u32 2, %s21
      $region40: #{relative_frame_transformation.1} parent=35 // pred_fallthru
        _
    $region36: #{relative_frame_transformation.1} parent=5 // pred_fallthru
      _
    %p691 = scmp.le.s32.totalorder 2, %s10
    // Predicated region
    $region41: #{relative_frame_transformation.1} parent=5 // pred_check
      %p692 = pneg %p691
    $region42: #{relative_frame_transformation.1} parent=5 // pred_check_branch
      %694 = sbr.rel (%p692) target = $region44
    $region43: #{relative_frame_transformation.1} parent=5 // pred_region
      %s695 = ssub.s32 %s10, 2
      // Predicated region
      $region45: #{relative_frame_transformation.1} parent=43 // pred_check
        %p696 = pneg %p174
      $region46: #{relative_frame_transformation.1} parent=43 // pred_check_branch
        %698 = sbr.rel (%p696) target = $region48
      $region47: #{relative_frame_transformation.1} parent=43 // pred_region
        %s699 = smul.u32 2, %s24
        %p700 = scmp.lt.s32.totalorder %s23, 1
        %s701 = scalar_select %p700, %s23, 1
        %p702 = scmp.lt.s32.totalorder %s699, 1
        %s703 = scalar_select %p702, %s699, 1
        %p704 = scmp.lt.s32.totalorder %s25, 0
        %s705 = scalar_select %p704, %s25, 0
        %s706 = sadd.s32 %s705, %s703
        %s707 = smul.addr %s701, 32
        %s708 = sadd.s32 %s706, %s707
        %s709 = smul.addr %s708, 8
        %s710 = scalar_lea.vmem %s4, %s709
      $region48: #{relative_frame_transformation.1} parent=43 // pred_fallthru
        _
    $region44: #{relative_frame_transformation.1} parent=5 // pred_fallthru
      _
  $region6: #{relative_frame_transformation.1} parent=0 // loop_footer
    %s14 = sadd.s32 1, %s10
  $region7: #{relative_frame_transformation.1} parent=0 // loop_footer_branch
    %9 = sbr.rel target = $region3
  $region8: #{relative_frame_transformation.1} parent=0 // loop_exit
    _

</llo_original>
